<compile_context>
chip_gen: v7x
topology: tpu7x:2x2x1
jax: 0.10.0
libtpu: 0.0.40
codegen_flags: <defaults>
</compile_context>

<pallas_src>
import functools

import jax
import jax.numpy as jnp
from jax.experimental import pallas as pl
from jax.experimental.pallas import tpu as pltpu


def _rbf_kernel(x_ref, c_ref, o_ref, *, gamma):
    x = x_ref[...]            # (TB, F)     float32
    c = c_ref[...]            # (C_pad, F)  float32

    # Row norms (tiny VPU + XLU work, negligible next to the matmul).
    x_norm = jnp.sum(x * x, axis=1, keepdims=True)      # (TB, 1)
    c_norm = jnp.sum(c * c, axis=1, keepdims=True)      # (C_pad, 1)

    # Cross term x @ c^T on the MXU (contract over the feature axis).
    # Kept in f32 to stay within the 1e-5 tolerance vs the PyTorch reduction.
    cross = jax.lax.dot_general(
        x, c, (((1,), (1,)), ((), ())),
        preferred_element_type=jnp.float32)              # (TB, C_pad)

    # Squared distance; clamp tiny negatives from FP cancellation.
    dist = jnp.maximum(x_norm + c_norm.T - 2.0 * cross, 0.0)

    # exp lowers to the EUP slot -> does not compete with MXU/VPU.
    o_ref[...] = jnp.exp(-gamma * dist).astype(o_ref.dtype)


def rbf_forward(x, centers, gamma=0.05, *, batch_tile=512):
    """Pallas TPU implementation of the rbf module's forward pass."""
    B, F = x.shape
    C, Fc = centers.shape
    assert F == Fc, "feature dims must match"

    # Lane-dense output: pad the class axis up to a multiple of 128 lanes.
    C_pad = ((C + 127) // 128) * 128
    if C_pad != C:
        centers_p = jnp.pad(centers, ((0, C_pad - C), (0, 0)))
    else:
        centers_p = centers

    # Batch tile: biggest that fits comfortably in (double-buffered) VMEM,
    # sized conservatively so it also fits v7x's smaller VMEM.
    TB = min(B, batch_tile)
    grid = (pl.cdiv(B, TB),)

    kernel = functools.partial(_rbf_kernel, gamma=gamma)

    cost = pl.CostEstimate(
        flops=2 * B * C_pad * F + 4 * B * C_pad,
        transcendentals=B * C_pad,
        bytes_accessed=4 * (B * F + C_pad * F + B * C_pad),
    )

    out_padded = pl.pallas_call(
        kernel,
        out_shape=jax.ShapeDtypeStruct((B, C_pad), x.dtype),
        grid=grid,
        in_specs=[
            pl.BlockSpec((TB, F), lambda i: (i, 0)),       # x: pipelined per tile
            pl.BlockSpec((C_pad, F), lambda i: (0, 0)),    # centers: resident
        ],
        out_specs=pl.BlockSpec((TB, C_pad), lambda i: (i, 0)),
        compiler_params=pltpu.CompilerParams(
            dimension_semantics=("parallel",),
        ),
        cost_estimate=cost,
    )(x, centers_p)

    # Slice back to the real number of classes.
    return out_padded[:, :C]


def rbf_reference(x, centers, gamma=0.05):
    diff = x[:, None, :] - centers[None, :, :]
    dist = jnp.sum(diff * diff, axis=2)
    return jnp.exp(-gamma * dist)


if __name__ == "__main__":
    key = jax.random.PRNGKey(0)
    k_x, k_c = jax.random.split(key)

    batch = 2
    in_features = 32      # flattened feature vector fed to the RBF layer
    num_classes = 10
    gamma = 0.05

    # Deterministic synthetic parameters / inputs (torch.randn analogue).
    x = jax.random.normal(k_x, (batch, in_features), dtype=jnp.float32)
    centers = jax.random.normal(k_c, (num_classes, in_features), dtype=jnp.float32)

    out = rbf_forward(x, centers, gamma=gamma)
    out = jax.block_until_ready(out)

    ref = rbf_reference(x, centers, gamma=gamma)
    assert out.shape == (batch, num_classes)
    assert jnp.allclose(out, ref, atol=1e-5, rtol=1e-5), "mismatch vs reference"

    print("KERNEL_OK")
</pallas_src>

<mosaic_0001>
module attributes {stable_mosaic.version = 11 : i64} {
  func.func @_rbf_kernel(%arg0: i32, %arg1: memref<2x32xf32, #tpu.memory_space<vmem>>, %arg2: memref<128x32xf32, #tpu.memory_space<vmem>>, %arg3: memref<2x128xf32, #tpu.memory_space<vmem>>) attributes {dimension_semantics = [#tpu.dimension_semantics<parallel>], iteration_bounds = array<i64: 1>, scalar_prefetch = 0 : i64, scratch_operands = 0 : i64, tpu.core_type = #tpu.core_type<tc>, window_params = [{transform_indices = @transform_0, window_bounds = array<i64: 2, 32>}, {pipeline_mode = #tpu.pipeline_mode<synchronous>, transform_indices = @transform_1, window_bounds = array<i64: 128, 32>}, {transform_indices = @transform_2, window_bounds = array<i64: 2, 128>}]} {
    %c0 = arith.constant 0 : index
    %c0_0 = arith.constant 0 : index
    %0 = vector.load %arg1[%c0, %c0_0] : memref<2x32xf32, #tpu.memory_space<vmem>>, vector<2x32xf32>
    %c0_1 = arith.constant 0 : index
    %c0_2 = arith.constant 0 : index
    %1 = vector.load %arg2[%c0_1, %c0_2] : memref<128x32xf32, #tpu.memory_space<vmem>>, vector<128x32xf32>
    %2 = arith.mulf %0, %0 : vector<2x32xf32>
    %cst = arith.constant dense<0.000000e+00> : vector<2xf32>
    %3 = vector.multi_reduction <add>, %2, %cst [1] : vector<2x32xf32> to vector<2xf32>
    %4 = vector.shape_cast %3 : vector<2xf32> to vector<2x1xf32>
    %5 = arith.mulf %1, %1 : vector<128x32xf32>
    %cst_3 = arith.constant dense<0.000000e+00> : vector<128xf32>
    %6 = vector.multi_reduction <add>, %5, %cst_3 [1] : vector<128x32xf32> to vector<128xf32>
    %7 = vector.shape_cast %6 : vector<128xf32> to vector<128x1xf32>
    %cst_4 = arith.constant dense<0.000000e+00> : vector<2x128xf32>
    %8 = tpu.matmul %0, %1, %cst_4 {dimension_numbers = #tpu.dot_dimension_numbers<[1], [1], [0], [0], [0, 0, 1, 0], [], []>} : vector<2x32xf32>, vector<128x32xf32>, vector<2x128xf32> -> vector<2x128xf32>
    %9 = tpu.transpose %7, [1, 0] : vector<128x1xf32> -> vector<1x128xf32>
    %10 = vector.broadcast %4 : vector<2x1xf32> to vector<2x128xf32>
    %11 = vector.broadcast %9 : vector<1x128xf32> to vector<2x128xf32>
    %12 = arith.addf %10, %11 : vector<2x128xf32>
    %cst_5 = arith.constant 2.000000e+00 : f32
    %13 = vector.broadcast %cst_5 : f32 to vector<2x128xf32>
    %14 = arith.mulf %13, %8 : vector<2x128xf32>
    %15 = arith.subf %12, %14 : vector<2x128xf32>
    %cst_6 = arith.constant 0.000000e+00 : f32
    %16 = vector.broadcast %cst_6 : f32 to vector<2x128xf32>
    %17 = arith.maximumf %15, %16 : vector<2x128xf32>
    %cst_7 = arith.constant -5.000000e-02 : f32
    %18 = vector.broadcast %cst_7 : f32 to vector<2x128xf32>
    %19 = arith.mulf %18, %17 : vector<2x128xf32>
    %20 = math.exp %19 : vector<2x128xf32>
    %c0_8 = arith.constant 0 : index
    %c0_9 = arith.constant 0 : index
    %21 = vector.load %arg3[%c0_8, %c0_9] : memref<2x128xf32, #tpu.memory_space<vmem>>, vector<2x128xf32>
    tpu.vector_store %arg3[%c0_8, %c0_9], %20 {strides = array<i32>} : memref<2x128xf32, #tpu.memory_space<vmem>>, vector<2x128xf32>,
    return
  }
  func.func @transform_0(%arg0: i32) -> (i32, i32) {
    %c0_i32 = arith.constant 0 : i32
    %c0_i32_0 = arith.constant 0 : i32
    return %arg0, %c0_i32 : i32, i32
  }
  func.func @transform_1(%arg0: i32) -> (i32, i32) {
    %c0_i32 = arith.constant 0 : i32
    %c0_i32_0 = arith.constant 0 : i32
    %c0_i32_1 = arith.constant 0 : i32
    return %c0_i32, %c0_i32_0 : i32, i32
  }
  func.func @transform_2(%arg0: i32) -> (i32, i32) {
    %c0_i32 = arith.constant 0 : i32
    %c0_i32_0 = arith.constant 0 : i32
    return %arg0, %c0_i32 : i32, i32
  }
}

</mosaic_0001>

<llo_original>
// kernel: tpu_custom_call.1
$region0: #{tpu_custom_call.1}
  #allocation0 [shape = 'u32[]', space=smem, size = 0x4, offset = 0x4, fixed_abs, tag = 'smem constant byte address 0x4 - core index']
  #allocation1 [shape = 'u32[144,128]{1,0:T(1,128)}', space=vmem, size = 0x12000, scoped, tag = 'internal scratch']
  %s0 = inlined_call_operand.vmem [shape: f32[2,32], index: 0, kind: input, shape index: {}]
  %s1 = inlined_call_operand.vmem [shape: f32[128,32], index: 1, kind: input, shape index: {}]
  %s2 = inlined_call_operand.hbm [shape: f32[2,128], index: 2, kind: output, shape index: {}]
  %s3 = sld [smem:[#allocation0]]
  $region18: #{tpu_custom_call.1} parent=0
    _
  %s5 = ssub.s32 1, %s3
  %s6 = scalar_select 0, %s5, %s3
  $region1: #{tpu_custom_call.1} parent=0
    #allocation2 [shape = 'u8[1024]{0}', space=vmem, size = 0x400, scoped, tag = 'output window, operand 0, single buffered']
    #allocation3 [shape = 's32[1]{0}', space=sflag, size = 0x4, scoped, tag = 'scoped memory for tpu_custom_call.1']
    %7 = vsyncpa [#allocation3], 0
    // Predicated region
    $region2: #{tpu_custom_call.1} parent=1 // pred_check
      _
    $region3: #{tpu_custom_call.1} parent=1 // pred_check_branch
      %9 = sbr.rel (0) target = $region5
    $region4: #{tpu_custom_call.1} parent=1 // pred_region
      _
    $region5: #{tpu_custom_call.1} parent=1 // pred_fallthru
      _
    // Predicated region
    $region6: #{tpu_custom_call.1} parent=1 // pred_check
      _
    $region7: #{tpu_custom_call.1} parent=1 // pred_check_branch
      %11 = sbr.rel (0) target = $region9
    $region8: #{tpu_custom_call.1} parent=1 // pred_region
      _
    $region9: #{tpu_custom_call.1} parent=1 // pred_fallthru
      _
    %v12 = vld [vmem:[%s0] sm:$0x3]
    %v13 = vld [vmem:[%s1] sm:$0xff]
    %v14 = vld [vmem:[%s1 + $0x8] sm:$0xff]
    %v15 = vld [vmem:[%s1 + $0x10] sm:$0xff]
    %v16 = vld [vmem:[%s1 + $0x18] sm:$0xff]
    %v17 = vld [vmem:[%s1 + $0x20] sm:$0xff]
    %v18 = vld [vmem:[%s1 + $0x28] sm:$0xff]
    %v19 = vld [vmem:[%s1 + $0x30] sm:$0xff]
    %v20 = vld [vmem:[%s1 + $0x38] sm:$0xff]
    %v21 = vld [vmem:[%s1 + $0x40] sm:$0xff]
    %v22 = vld [vmem:[%s1 + $0x48] sm:$0xff]
    %v23 = vld [vmem:[%s1 + $0x50] sm:$0xff]
    %v24 = vld [vmem:[%s1 + $0x58] sm:$0xff]
    %v25 = vld [vmem:[%s1 + $0x60] sm:$0xff]
    %v26 = vld [vmem:[%s1 + $0x68] sm:$0xff]
    %v27 = vld [vmem:[%s1 + $0x70] sm:$0xff]
    %v28 = vld [vmem:[%s1 + $0x78] sm:$0xff]
    %v29 = vmul.f32 %v12, %v12
    %vm30 = vcmask 254976
    %v31 = vsel %vm30, %v29, 0.0
    %32 = vadd.xlane.f32.xlu0 %v31
    %v33 = vpop.xlane.xlu0 %32
    %v34 = vmul.f32 %v13, %v13
    %v35 = vmul.f32 %v14, %v14
    %v36 = vmul.f32 %v15, %v15
    %v37 = vmul.f32 %v16, %v16
    %v38 = vmul.f32 %v17, %v17
    %v39 = vmul.f32 %v18, %v18
    %v40 = vmul.f32 %v19, %v19
    %v41 = vmul.f32 %v20, %v20
    %v42 = vmul.f32 %v21, %v21
    %v43 = vmul.f32 %v22, %v22
    %v44 = vmul.f32 %v23, %v23
    %v45 = vmul.f32 %v24, %v24
    %v46 = vmul.f32 %v25, %v25
    %v47 = vmul.f32 %v26, %v26
    %v48 = vmul.f32 %v27, %v27
    %v49 = vmul.f32 %v28, %v28
    %vm50 = vcmask 261120
    %v51 = vsel %vm50, %v34, 0.0
    %52 = vadd.xlane.f32.xlu0 %v51
    %v53 = vpop.xlane.xlu0 %52
    %v54 = vsel %vm50, %v35, 0.0
    %55 = vadd.xlane.f32.xlu0 %v54
    %v56 = vpop.xlane.xlu0 %55
    %v57 = vsel %vm50, %v36, 0.0
    %58 = vadd.xlane.f32.xlu0 %v57
    %v59 = vpop.xlane.xlu0 %58
    %v60 = vsel %vm50, %v37, 0.0
    %61 = vadd.xlane.f32.xlu0 %v60
    %v62 = vpop.xlane.xlu0 %61
    %v63 = vsel %vm50, %v38, 0.0
    %64 = vadd.xlane.f32.xlu0 %v63
    %v65 = vpop.xlane.xlu0 %64
    %v66 = vsel %vm50, %v39, 0.0
    %67 = vadd.xlane.f32.xlu0 %v66
    %v68 = vpop.xlane.xlu0 %67
    %v69 = vsel %vm50, %v40, 0.0
    %70 = vadd.xlane.f32.xlu0 %v69
    %v71 = vpop.xlane.xlu0 %70
    %v72 = vsel %vm50, %v41, 0.0
    %73 = vadd.xlane.f32.xlu0 %v72
    %v74 = vpop.xlane.xlu0 %73
    %v75 = vsel %vm50, %v42, 0.0
    %76 = vadd.xlane.f32.xlu0 %v75
    %v77 = vpop.xlane.xlu0 %76
    %v78 = vsel %vm50, %v43, 0.0
    %79 = vadd.xlane.f32.xlu0 %v78
    %v80 = vpop.xlane.xlu0 %79
    %v81 = vsel %vm50, %v44, 0.0
    %82 = vadd.xlane.f32.xlu0 %v81
    %v83 = vpop.xlane.xlu0 %82
    %v84 = vsel %vm50, %v45, 0.0
    %85 = vadd.xlane.f32.xlu0 %v84
    %v86 = vpop.xlane.xlu0 %85
    %v87 = vsel %vm50, %v46, 0.0
    %88 = vadd.xlane.f32.xlu0 %v87
    %v89 = vpop.xlane.xlu0 %88
    %v90 = vsel %vm50, %v47, 0.0
    %91 = vadd.xlane.f32.xlu0 %v90
    %v92 = vpop.xlane.xlu0 %91
    %v93 = vsel %vm50, %v48, 0.0
    %94 = vadd.xlane.f32.xlu0 %v93
    %v95 = vpop.xlane.xlu0 %94
    %v96 = vsel %vm50, %v49, 0.0
    %97 = vadd.xlane.f32.xlu0 %v96
    %v98 = vpop.xlane.xlu0 %97
    %v100 = vsel %vm50, %v12, 0
    %v103 = vsel %vm50, %v13, 0
    %v106 = vsel %vm50, %v14, 0
    %v109 = vsel %vm50, %v15, 0
    %v112 = vsel %vm50, %v16, 0
    %v115 = vsel %vm50, %v17, 0
    %v118 = vsel %vm50, %v18, 0
    %v121 = vsel %vm50, %v19, 0
    %v124 = vsel %vm50, %v20, 0
    %v127 = vsel %vm50, %v21, 0
    %v130 = vsel %vm50, %v22, 0
    %v133 = vsel %vm50, %v23, 0
    %v136 = vsel %vm50, %v24, 0
    %v139 = vsel %vm50, %v25, 0
    %v142 = vsel %vm50, %v26, 0
    %v145 = vsel %vm50, %v27, 0
    %v148 = vsel %vm50, %v28, 0
    %150 = vmatprep.subr.mxu0 0.0
    %151 = vmatpush1.xpose.msra.mxu0 %v103
    %152 = vmatprep.subr.mxu0 0.0
    %153 = vmatpush1.xpose.msra.mxu0 %v106
    %154 = vmatprep.subr.mxu0 0.0
    %155 = vmatpush1.xpose.msra.mxu0 %v109
    %156 = vmatprep.subr.mxu0 0.0
    %157 = vmatpush1.xpose.msra.mxu0 %v112
    %158 = vmatprep.subr.mxu0 0.0
    %159 = vmatpush1.xpose.msra.mxu0 %v115
    %160 = vmatprep.subr.mxu0 0.0
    %161 = vmatpush1.xpose.msra.mxu0 %v118
    %162 = vmatprep.subr.mxu0 0.0
    %163 = vmatpush1.xpose.msra.mxu0 %v121
    %164 = vmatprep.subr.mxu0 0.0
    %165 = vmatpush1.xpose.msra.mxu0 %v124
    %166 = vmatprep.subr.mxu0 0.0
    %167 = vmatpush1.xpose.msra.mxu0 %v127
    %168 = vmatprep.subr.mxu0 0.0
    %169 = vmatpush1.xpose.msra.mxu0 %v130
    %170 = vmatprep.subr.mxu0 0.0
    %171 = vmatpush1.xpose.msra.mxu0 %v133
    %172 = vmatprep.subr.mxu0 0.0
    %173 = vmatpush1.xpose.msra.mxu0 %v136
    %174 = vmatprep.subr.mxu0 0.0
    %175 = vmatpush1.xpose.msra.mxu0 %v139
    %176 = vmatprep.subr.mxu0 0.0
    %177 = vmatpush1.xpose.msra.mxu0 %v142
    %178 = vmatprep.subr.mxu0 0.0
    %179 = vmatpush1.xpose.msra.mxu0 %v145
    %180 = vmatprep.subr.mxu0 0.0
    %181 = vmatpush1.xpose.msra.mxu0 %v148
    %182 = vmatprep.subr.mxu0 0.0
    %183 = vmatpush1.xpose.msra.mxu0 0.0
    %184 = vmatprep.subr.mxu0 0.0
    %185 = vmatpush1.xpose.msra.mxu0 0.0
    %186 = vmatprep.subr.mxu0 0.0
    %187 = vmatpush1.xpose.msra.mxu0 0.0
    %188 = vmatprep.subr.mxu0 0.0
    %189 = vmatpush1.xpose.msra.mxu0 0.0
    %190 = vmatprep.subr.mxu0 0.0
    %191 = vmatpush1.xpose.msra.mxu0 0.0
    %192 = vmatprep.subr.mxu0 0.0
    %193 = vmatpush1.xpose.msra.mxu0 0.0
    %194 = vmatprep.subr.mxu0 0.0
    %195 = vmatpush1.xpose.msra.mxu0 0.0
    %196 = vmatprep.subr.mxu0 0.0
    %197 = vmatpush1.xpose.msra.mxu0 0.0
    %198 = vmatprep.subr.mxu0 0.0
    %199 = vmatpush1.xpose.msra.mxu0 0.0
    %200 = vmatprep.subr.mxu0 0.0
    %201 = vmatpush1.xpose.msra.mxu0 0.0
    %202 = vmatprep.subr.mxu0 0.0
    %203 = vmatpush1.xpose.msra.mxu0 0.0
    %204 = vmatprep.subr.mxu0 0.0
    %205 = vmatpush1.xpose.msra.mxu0 0.0
    %206 = vmatprep.subr.mxu0 0.0
    %207 = vmatpush1.xpose.msra.mxu0 0.0
    %208 = vmatprep.subr.mxu0 0.0
    %209 = vmatpush1.xpose.msra.mxu0 0.0
    %210 = vmatprep.subr.mxu0 0.0
    %211 = vmatpush1.xpose.msra.mxu0 0.0
    %212 = vmatprep.subr.mxu0 0.0
    %213 = vmatpush1.xpose.msra.mxu0 0.0
    %214 = vmatprep.mubr.f32.mxu0 0.0
    %215 = vmatmul.mubr.f32.gmra.mrb[0].mxu0 %v100
    %v216 = vpop.f32.mrb[0].mxu0
    %v217 = vadd.f32 0.0, %v216
    %v218 = vpop.f32.mrb[0].mxu0
    %219 = vdwg.mxu0
    %220 = vxpose.xlu0.b32.start [1/16] %v53, 128
    %221 = vxpose.xlu0.b32.cont [2/16] %v56, 128
    %222 = vxpose.xlu0.b32.cont [3/16] %v59, 128
    %223 = vxpose.xlu0.b32.cont [4/16] %v62, 128
    %224 = vxpose.xlu0.b32.cont [5/16] %v65, 128
    %225 = vxpose.xlu0.b32.cont [6/16] %v68, 128
    %226 = vxpose.xlu0.b32.cont [7/16] %v71, 128
    %227 = vxpose.xlu0.b32.cont [8/16] %v74, 128
    %228 = vxpose.xlu0.b32.cont [9/16] %v77, 128
    %229 = vxpose.xlu0.b32.cont [10/16] %v80, 128
    %230 = vxpose.xlu0.b32.cont [11/16] %v83, 128
    %231 = vxpose.xlu0.b32.cont [12/16] %v86, 128
    %232 = vxpose.xlu0.b32.cont [13/16] %v89, 128
    %233 = vxpose.xlu0.b32.cont [14/16] %v92, 128
    %234 = vxpose.xlu0.b32.cont [15/16] %v95, 128
    %235 = vxpose.xlu0.b32.end [16/16] %v98, 128
    %v236 = vpop.trf.xlu0
    %v237 = vpop.trf.xlu0
    %v238 = vpop.trf.xlu0
    %v239 = vpop.trf.xlu0
    %v240 = vpop.trf.xlu0
    %v241 = vpop.trf.xlu0
    %v242 = vpop.trf.xlu0
    %v243 = vpop.trf.xlu0
    %v244 = vpop.trf.xlu0
    %v245 = vpop.trf.xlu0
    %v246 = vpop.trf.xlu0
    %v247 = vpop.trf.xlu0
    %v248 = vpop.trf.xlu0
    %v249 = vpop.trf.xlu0
    %v250 = vpop.trf.xlu0
    %v251 = vpop.trf.xlu0
    %v252 = vlaneseq
    %v253 = vshrl.u32 %v252, 7
    %v254 = vsub.s32 0, %v253
    %v255 = vrot.slane %v236, %v254
    %v256 = vadd.f32 %v33, %v255
    %v257 = vmul.f32 %v217, 2.0
    %v258 = vsub.f32 %v256, %v257
    %v259 = vmax.f32 %v258, 0.0
    %v260 = vmul.f32 %v259, -0.05
    %v261 = vmul.f32 %v260, 1.442695
    %v262 = vpow.pop %v261
    %263 = vst [vmem:[#allocation2] sm:$0x3] %v262
    // Predicated region
    $region10: #{tpu_custom_call.1} parent=1 // pred_check
      _
    $region11: #{tpu_custom_call.1} parent=1 // pred_check_branch
      %265 = sbr.rel (0) target = $region13
    $region12: #{tpu_custom_call.1} parent=1 // pred_region
      %s267 = ssub.s32 32, 32
      %268 = vsyncadd [#allocation3], %s267
      %s270 = sshll.u32 [#allocation2], 4
      %s271 = int_to_ptr.vmem [resolvable:$true] %s270
      %273 = dma.vmem_to_hbm [thread:$0]  %s271, 32, %s2, [#allocation3]
    $region13: #{tpu_custom_call.1} parent=1 // pred_fallthru
      _
    // Predicated region
    $region14: #{tpu_custom_call.1} parent=1 // pred_check
      _
    $region15: #{tpu_custom_call.1} parent=1 // pred_check_branch
      %275 = sbr.rel (0) target = $region17
    $region16: #{tpu_custom_call.1} parent=1 // pred_region
      %276 = dma.done [#allocation3], 32
    $region17: #{tpu_custom_call.1} parent=1 // pred_fallthru
      _
    %277 = vsyncpa [#allocation3], 1

</llo_original>
